<compile_context>
chip_gen: v7x
topology: tpu7x:2x2x1
jax: 0.10.0
libtpu: 0.0.40
codegen_flags: <defaults>
</compile_context>

<pallas_src>
import jax
import jax.numpy as jnp
from jax.experimental import pallas as pl
from jax.experimental.pallas import tpu as pltpu


# ----------------------------------------------------------------------------
# Fused Pallas kernel: conv1 -> relu -> conv2 -> relu -> lin1 -> relu -> lin2
# ----------------------------------------------------------------------------
def _fused_gcn_kernel(a_ref, x_ref,
                      c1ws_ref, c1wn_ref, c1b_ref,
                      c2ws_ref, c2wn_ref, c2b_ref,
                      l1w_ref, l1b_ref,
                      l2w_ref, l2b_ref,
                      o_ref):
    """All operands fully resident in VMEM; only o_ref (N, num_classes) is written back.

    a_ref   : (N, N)     row-normalized weighted adjacency (incl. self loops), bf16
    x_ref   : (N, F0)    node features, bf16
    c*ws/wn : (Fin,Fout) self / neighbor halves of the SAGEConvCat concat-Linear, bf16
    c*b     : (1, Fout)  bias, f32
    l*w/b   : lin layer weight (bf16) / bias (f32)
    o_ref   : (N, num_classes) f32 pre-normalized class scores
    """
    cdt = a_ref.dtype  # bf16 compute dtype for MXU operands
    a = a_ref[...]
    x = x_ref[...]

    # ---- conv1 (weighted-mean SAGEConvCat) + relu ----
    agg = jnp.dot(a, x, preferred_element_type=jnp.float32).astype(cdt)
    h = (jnp.dot(x, c1ws_ref[...], preferred_element_type=jnp.float32)
         + jnp.dot(agg, c1wn_ref[...], preferred_element_type=jnp.float32)
         + c1b_ref[...])
    h = jnp.maximum(h, 0.0).astype(cdt)

    # ---- conv2 + relu ----
    agg = jnp.dot(a, h, preferred_element_type=jnp.float32).astype(cdt)
    h = (jnp.dot(h, c2ws_ref[...], preferred_element_type=jnp.float32)
         + jnp.dot(agg, c2wn_ref[...], preferred_element_type=jnp.float32)
         + c2b_ref[...])
    h = jnp.maximum(h, 0.0).astype(cdt)

    # ---- dropout(p=0.5, training=False) -> identity at inference ----

    # ---- lin1 + relu (f32 epilogue) ----
    h = jnp.dot(h, l1w_ref[...], preferred_element_type=jnp.float32) + l1b_ref[...]
    h = jnp.maximum(h, 0.0).astype(cdt)

    # ---- lin2 -> pre-normalized class scores (single HBM store of the kernel) ----
    o_ref[...] = (jnp.dot(h, l2w_ref[...], preferred_element_type=jnp.float32)
                  + l2b_ref[...])


def gcn_classification_weighted_forward(x, a_norm, params):
    n = x.shape[0]
    num_classes = params["l2_w"].shape[1]
    args = (a_norm, x,
            params["c1_w_self"], params["c1_w_neigh"], params["c1_b"],
            params["c2_w_self"], params["c2_w_neigh"], params["c2_b"],
            params["l1_w"], params["l1_b"],
            params["l2_w"], params["l2_b"])
    vmem_spec = lambda: pl.BlockSpec(memory_space=pltpu.MemorySpace.VMEM)
    return pl.pallas_call(
        _fused_gcn_kernel,
        out_shape=jax.ShapeDtypeStruct((n, num_classes), jnp.float32),
        in_specs=[vmem_spec() for _ in args],
        out_specs=vmem_spec(),
    )(*args)


# ----------------------------------------------------------------------------
# Glue: weighted adjacency (matches SAGEConvCat weighted message, aggr='mean')
# ----------------------------------------------------------------------------
def build_weighted_adjacency(edge_index, edge_attr, num_nodes, dtype=jnp.bfloat16):
    """A_norm[i, j] = sum of w_ij over edges j->i (self-loops removed, duplicates summed),
    plus a self-loop of weight 1, divided by the number of messages into node i
    (duplicate edges counted, +1 for the self-loop) — i.e. PyG aggr='mean'."""
    src = edge_index[0]
    dst = edge_index[1]
    not_self = (src != dst).astype(jnp.float32)
    w = edge_attr.astype(jnp.float32) * not_self  # remove original self loops
    a = jnp.zeros((num_nodes, num_nodes), jnp.float32).at[dst, src].add(w)
    a = a + jnp.eye(num_nodes, dtype=jnp.float32)  # add self loops (weight 1)
    deg = jnp.zeros((num_nodes,), jnp.float32).at[dst].add(not_self) + 1.0
    # TODO(synk): exact GC-MERGE weighted_agg normalization (mean-by-message-count vs
    # mean-by-weight-sum) depends on its SAGEConvCat implementation; message-count used here.
    return (a / deg[:, None]).astype(dtype)


# ----------------------------------------------------------------------------
# Main
# ----------------------------------------------------------------------------
if __name__ == "__main__":
    # Small config consistent with the module:
    #   num_feat = 8, num_graph_conv_layers = 2, graph_conv_layer_sizes = [8, 32, 32]
    #   num_lin_layers = 2, lin_hidden_sizes = [32, 32, 2], num_classes = 2, num_nodes = 64
    num_nodes = 64
    num_feat = 8
    gcs = [8, 32, 32]
    lhs = [32, 32, 2]
    num_edges = 256
    cdt = jnp.bfloat16

    key = jax.random.PRNGKey(0)
    keys = jax.random.split(key, 8)

    # Inputs
    x = jax.random.normal(keys[0], (num_nodes, num_feat), dtype=jnp.float32)
    edge_index = jax.random.randint(keys[1], (2, num_edges), 0, num_nodes, dtype=jnp.int32)
    edge_attr = jax.random.uniform(keys[2], (num_edges,), dtype=jnp.float32,
                                   minval=0.1, maxval=2.0)

    # Deterministic parameter init. SAGEConvCat.lin is Linear(2*Fin, Fout); split W.T into
    # self / neighbor halves matching concat([x, agg]) order.
    def init_linear(k, fan_in, fan_out):
        kw, kb = jax.random.split(k)
        scale = 1.0 / jnp.sqrt(fan_in)
        w = jax.random.uniform(kw, (fan_in, fan_out), jnp.float32, -scale, scale)
        b = jax.random.uniform(kb, (1, fan_out), jnp.float32, -scale, scale)
        return w, b

    c1_w, c1_b = init_linear(keys[3], 2 * gcs[0], gcs[1])
    c2_w, c2_b = init_linear(keys[4], 2 * gcs[1], gcs[2])
    l1_w, l1_b = init_linear(keys[5], lhs[0], lhs[1])
    l2_w, l2_b = init_linear(keys[6], lhs[1], lhs[2])

    # Matmul operands in bf16, biases stay f32 (added to f32 accumulators in-kernel).
    params = {
        "c1_w_self": c1_w[: gcs[0]].astype(cdt),
        "c1_w_neigh": c1_w[gcs[0]:].astype(cdt),
        "c1_b": c1_b,
        "c2_w_self": c2_w[: gcs[1]].astype(cdt),
        "c2_w_neigh": c2_w[gcs[1]:].astype(cdt),
        "c2_b": c2_b,
        "l1_w": l1_w.astype(cdt), "l1_b": l1_b,
        "l2_w": l2_w.astype(cdt), "l2_b": l2_b,
    }

    a_norm = build_weighted_adjacency(edge_index, edge_attr, num_nodes, dtype=cdt)
    x_c = x.astype(cdt)

    scores = gcn_classification_weighted_forward(x_c, a_norm, params)
    scores = jax.block_until_ready(scores)

    assert scores.shape == (num_nodes, lhs[2])
    assert jnp.all(jnp.isfinite(scores))
    print("KERNEL_OK")
</pallas_src>

<mosaic_0001>
module attributes {stable_mosaic.version = 11 : i64} {
  func.func @_fused_gcn_kernel(%arg0: memref<64x64xbf16, #tpu.memory_space<vmem>>, %arg1: memref<64x8xbf16, #tpu.memory_space<vmem>>, %arg2: memref<8x32xbf16, #tpu.memory_space<vmem>>, %arg3: memref<8x32xbf16, #tpu.memory_space<vmem>>, %arg4: memref<1x32xf32, #tpu.memory_space<vmem>>, %arg5: memref<32x32xbf16, #tpu.memory_space<vmem>>, %arg6: memref<32x32xbf16, #tpu.memory_space<vmem>>, %arg7: memref<1x32xf32, #tpu.memory_space<vmem>>, %arg8: memref<32x32xbf16, #tpu.memory_space<vmem>>, %arg9: memref<1x32xf32, #tpu.memory_space<vmem>>, %arg10: memref<32x2xbf16, #tpu.memory_space<vmem>>, %arg11: memref<1x2xf32, #tpu.memory_space<vmem>>, %arg12: memref<64x2xf32, #tpu.memory_space<vmem>>) attributes {dimension_semantics = [], scalar_prefetch = 0 : i64, scratch_operands = 0 : i64, tpu.core_type = #tpu.core_type<tc>} {
    %c0 = arith.constant 0 : index
    %c0_0 = arith.constant 0 : index
    %0 = vector.load %arg0[%c0, %c0_0] : memref<64x64xbf16, #tpu.memory_space<vmem>>, vector<64x64xbf16>
    %c0_1 = arith.constant 0 : index
    %c0_2 = arith.constant 0 : index
    %1 = vector.load %arg1[%c0_1, %c0_2] : memref<64x8xbf16, #tpu.memory_space<vmem>>, vector<64x8xbf16>
    %cst = arith.constant dense<0.000000e+00> : vector<64x8xf32>
    %2 = tpu.matmul %0, %1, %cst {dimension_numbers = #tpu.dot_dimension_numbers<[1], [0], [0], [1], [0, 0, 1, 1], [], []>} : vector<64x64xbf16>, vector<64x8xbf16>, vector<64x8xf32> -> vector<64x8xf32>
    %3 = arith.truncf %2 : vector<64x8xf32> to vector<64x8xbf16>
    %c0_3 = arith.constant 0 : index
    %c0_4 = arith.constant 0 : index
    %4 = vector.load %arg2[%c0_3, %c0_4] : memref<8x32xbf16, #tpu.memory_space<vmem>>, vector<8x32xbf16>
    %cst_5 = arith.constant dense<0.000000e+00> : vector<64x32xf32>
    %5 = tpu.matmul %1, %4, %cst_5 {dimension_numbers = #tpu.dot_dimension_numbers<[1], [0], [0], [1], [0, 0, 1, 1], [], []>} : vector<64x8xbf16>, vector<8x32xbf16>, vector<64x32xf32> -> vector<64x32xf32>
    %c0_6 = arith.constant 0 : index
    %c0_7 = arith.constant 0 : index
    %6 = vector.load %arg3[%c0_6, %c0_7] : memref<8x32xbf16, #tpu.memory_space<vmem>>, vector<8x32xbf16>
    %cst_8 = arith.constant dense<0.000000e+00> : vector<64x32xf32>
    %7 = tpu.matmul %3, %6, %cst_8 {dimension_numbers = #tpu.dot_dimension_numbers<[1], [0], [0], [1], [0, 0, 1, 1], [], []>} : vector<64x8xbf16>, vector<8x32xbf16>, vector<64x32xf32> -> vector<64x32xf32>
    %8 = arith.addf %5, %7 : vector<64x32xf32>
    %c0_9 = arith.constant 0 : index
    %c0_10 = arith.constant 0 : index
    %9 = vector.load %arg4[%c0_9, %c0_10] : memref<1x32xf32, #tpu.memory_space<vmem>>, vector<1x32xf32>
    %10 = vector.broadcast %9 : vector<1x32xf32> to vector<64x32xf32>
    %11 = arith.addf %8, %10 : vector<64x32xf32>
    %cst_11 = arith.constant 0.000000e+00 : f32
    %12 = vector.broadcast %cst_11 : f32 to vector<64x32xf32>
    %13 = arith.maximumf %11, %12 : vector<64x32xf32>
    %14 = arith.truncf %13 : vector<64x32xf32> to vector<64x32xbf16>
    %cst_12 = arith.constant dense<0.000000e+00> : vector<64x32xf32>
    %15 = tpu.matmul %0, %14, %cst_12 {dimension_numbers = #tpu.dot_dimension_numbers<[1], [0], [0], [1], [0, 0, 1, 1], [], []>} : vector<64x64xbf16>, vector<64x32xbf16>, vector<64x32xf32> -> vector<64x32xf32>
    %16 = arith.truncf %15 : vector<64x32xf32> to vector<64x32xbf16>
    %c0_13 = arith.constant 0 : index
    %c0_14 = arith.constant 0 : index
    %17 = vector.load %arg5[%c0_13, %c0_14] : memref<32x32xbf16, #tpu.memory_space<vmem>>, vector<32x32xbf16>
    %cst_15 = arith.constant dense<0.000000e+00> : vector<64x32xf32>
    %18 = tpu.matmul %14, %17, %cst_15 {dimension_numbers = #tpu.dot_dimension_numbers<[1], [0], [0], [1], [0, 0, 1, 1], [], []>} : vector<64x32xbf16>, vector<32x32xbf16>, vector<64x32xf32> -> vector<64x32xf32>
    %c0_16 = arith.constant 0 : index
    %c0_17 = arith.constant 0 : index
    %19 = vector.load %arg6[%c0_16, %c0_17] : memref<32x32xbf16, #tpu.memory_space<vmem>>, vector<32x32xbf16>
    %cst_18 = arith.constant dense<0.000000e+00> : vector<64x32xf32>
    %20 = tpu.matmul %16, %19, %cst_18 {dimension_numbers = #tpu.dot_dimension_numbers<[1], [0], [0], [1], [0, 0, 1, 1], [], []>} : vector<64x32xbf16>, vector<32x32xbf16>, vector<64x32xf32> -> vector<64x32xf32>
    %21 = arith.addf %18, %20 : vector<64x32xf32>
    %c0_19 = arith.constant 0 : index
    %c0_20 = arith.constant 0 : index
    %22 = vector.load %arg7[%c0_19, %c0_20] : memref<1x32xf32, #tpu.memory_space<vmem>>, vector<1x32xf32>
    %23 = vector.broadcast %22 : vector<1x32xf32> to vector<64x32xf32>
    %24 = arith.addf %21, %23 : vector<64x32xf32>
    %cst_21 = arith.constant 0.000000e+00 : f32
    %25 = vector.broadcast %cst_21 : f32 to vector<64x32xf32>
    %26 = arith.maximumf %24, %25 : vector<64x32xf32>
    %27 = arith.truncf %26 : vector<64x32xf32> to vector<64x32xbf16>
    %c0_22 = arith.constant 0 : index
    %c0_23 = arith.constant 0 : index
    %28 = vector.load %arg8[%c0_22, %c0_23] : memref<32x32xbf16, #tpu.memory_space<vmem>>, vector<32x32xbf16>
    %cst_24 = arith.constant dense<0.000000e+00> : vector<64x32xf32>
    %29 = tpu.matmul %27, %28, %cst_24 {dimension_numbers = #tpu.dot_dimension_numbers<[1], [0], [0], [1], [0, 0, 1, 1], [], []>} : vector<64x32xbf16>, vector<32x32xbf16>, vector<64x32xf32> -> vector<64x32xf32>
    %c0_25 = arith.constant 0 : index
    %c0_26 = arith.constant 0 : index
    %30 = vector.load %arg9[%c0_25, %c0_26] : memref<1x32xf32, #tpu.memory_space<vmem>>, vector<1x32xf32>
    %31 = vector.broadcast %30 : vector<1x32xf32> to vector<64x32xf32>
    %32 = arith.addf %29, %31 : vector<64x32xf32>
    %cst_27 = arith.constant 0.000000e+00 : f32
    %33 = vector.broadcast %cst_27 : f32 to vector<64x32xf32>
    %34 = arith.maximumf %32, %33 : vector<64x32xf32>
    %35 = arith.truncf %34 : vector<64x32xf32> to vector<64x32xbf16>
    %c0_28 = arith.constant 0 : index
    %c0_29 = arith.constant 0 : index
    %36 = vector.load %arg10[%c0_28, %c0_29] : memref<32x2xbf16, #tpu.memory_space<vmem>>, vector<32x2xbf16>
    %cst_30 = arith.constant dense<0.000000e+00> : vector<64x2xf32>
    %37 = tpu.matmul %35, %36, %cst_30 {dimension_numbers = #tpu.dot_dimension_numbers<[1], [0], [0], [1], [0, 0, 1, 1], [], []>} : vector<64x32xbf16>, vector<32x2xbf16>, vector<64x2xf32> -> vector<64x2xf32>
    %c0_31 = arith.constant 0 : index
    %c0_32 = arith.constant 0 : index
    %38 = vector.load %arg11[%c0_31, %c0_32] : memref<1x2xf32, #tpu.memory_space<vmem>>, vector<1x2xf32>
    %39 = vector.broadcast %38 : vector<1x2xf32> to vector<64x2xf32>
    %40 = arith.addf %37, %39 : vector<64x2xf32>
    %c0_33 = arith.constant 0 : index
    %c0_34 = arith.constant 0 : index
    %41 = vector.load %arg12[%c0_33, %c0_34] : memref<64x2xf32, #tpu.memory_space<vmem>>, vector<64x2xf32>
    tpu.vector_store %arg12[%c0_33, %c0_34], %40 {strides = array<i32>} : memref<64x2xf32, #tpu.memory_space<vmem>>, vector<64x2xf32>,
    return
  }
}

</mosaic_0001>

<llo_original>
// kernel: tpu_custom_call.1
$region0: #{tpu_custom_call.1}
  #allocation0 [shape = 'u32[]', space=smem, size = 0x4, offset = 0x4, fixed_abs, tag = 'smem constant byte address 0x4 - core index']
  #allocation1 [shape = 'u32[144,128]{1,0:T(1,128)}', space=vmem, size = 0x12000, scoped, tag = 'internal scratch']
  %s0 = inlined_call_operand.vmem [shape: bf16[64,64], index: 0, kind: input, shape index: {}]
  %s1 = inlined_call_operand.vmem [shape: bf16[64,8], index: 1, kind: input, shape index: {}]
  %s2 = inlined_call_operand.hbm [shape: bf16[8,32], index: 2, kind: input, shape index: {}]
  %s3 = inlined_call_operand.hbm [shape: bf16[8,32], index: 3, kind: input, shape index: {}]
  %s4 = inlined_call_operand.vmem [shape: f32[1,32], index: 4, kind: input, shape index: {}]
  %s5 = inlined_call_operand.vmem [shape: bf16[32,32], index: 5, kind: input, shape index: {}]
  %s6 = inlined_call_operand.vmem [shape: bf16[32,32], index: 6, kind: input, shape index: {}]
  %s7 = inlined_call_operand.vmem [shape: f32[1,32], index: 7, kind: input, shape index: {}]
  %s8 = inlined_call_operand.vmem [shape: bf16[32,32], index: 8, kind: input, shape index: {}]
  %s9 = inlined_call_operand.vmem [shape: f32[1,32], index: 9, kind: input, shape index: {}]
  %s10 = inlined_call_operand.vmem [shape: bf16[32,2], index: 10, kind: input, shape index: {}]
  %s11 = inlined_call_operand.vmem [shape: f32[1,2], index: 11, kind: input, shape index: {}]
  %s12 = inlined_call_operand.vmem [shape: f32[64,2], index: 12, kind: output, shape index: {}]
  %s13 = sld [smem:[#allocation0]]
  $region66: #{tpu_custom_call.1} parent=0
    _
  %s15 = ssub.s32 1, %s13
  %s16 = scalar_select 0, %s15, %s13
  $region1: #{tpu_custom_call.1} parent=0
    #allocation2 [shape = 'u8[2048]{0}', space=vmem, size = 0x800, scoped, tag = 'input window, operand 2, single buffered']
    #allocation3 [shape = 's32[1]{0}', space=sflag, size = 0x4, scoped, tag = 'scoped memory for tpu_custom_call.1']
    #allocation4 [shape = 'u8[2048]{0}', space=vmem, size = 0x800, scoped, tag = 'input window, operand 3, single buffered']
    #allocation5 [shape = 's32[1]{0}', space=sflag, size = 0x4, scoped, tag = 'scoped memory for tpu_custom_call.1']
    %17 = vsyncpa [#allocation3], 0
    %18 = vsyncpa [#allocation5], 0
    // Predicated region
    $region2: #{tpu_custom_call.1} parent=1 // pred_check
      _
    $region3: #{tpu_custom_call.1} parent=1 // pred_check_branch
      %20 = sbr.rel (0) target = $region5
    $region4: #{tpu_custom_call.1} parent=1 // pred_region
      _
    $region5: #{tpu_custom_call.1} parent=1 // pred_fallthru
      _
    // Predicated region
    $region6: #{tpu_custom_call.1} parent=1 // pred_check
      _
    $region7: #{tpu_custom_call.1} parent=1 // pred_check_branch
      %22 = sbr.rel (0) target = $region9
    $region8: #{tpu_custom_call.1} parent=1 // pred_region
      _
    $region9: #{tpu_custom_call.1} parent=1 // pred_fallthru
      _
    // Predicated region
    $region10: #{tpu_custom_call.1} parent=1 // pred_check
      _
    $region11: #{tpu_custom_call.1} parent=1 // pred_check_branch
      %24 = sbr.rel (0) target = $region13
    $region12: #{tpu_custom_call.1} parent=1 // pred_region
      %s26 = ssub.s32 64, 64
      %27 = vsyncadd [#allocation3], %s26
      %s29 = sshll.u32 [#allocation2], 4
      %s30 = int_to_ptr.vmem [resolvable:$true] %s29
      %32 = dma.hbm_to_vmem [thread:$0]  %s2, 64, %s30, [#allocation3]
    $region13: #{tpu_custom_call.1} parent=1 // pred_fallthru
      _
    // Predicated region
    $region14: #{tpu_custom_call.1} parent=1 // pred_check
      _
    $region15: #{tpu_custom_call.1} parent=1 // pred_check_branch
      %34 = sbr.rel (0) target = $region17
    $region16: #{tpu_custom_call.1} parent=1 // pred_region
      %s36 = ssub.s32 64, 64
      %37 = vsyncadd [#allocation5], %s36
      %s39 = sshll.u32 [#allocation4], 4
      %s40 = int_to_ptr.vmem [resolvable:$true] %s39
      %42 = dma.hbm_to_vmem [thread:$0]  %s3, 64, %s40, [#allocation5]
    $region17: #{tpu_custom_call.1} parent=1 // pred_fallthru
      _
    // Predicated region
    $region18: #{tpu_custom_call.1} parent=1 // pred_check
      _
    $region19: #{tpu_custom_call.1} parent=1 // pred_check_branch
      %44 = sbr.rel (0) target = $region21
    $region20: #{tpu_custom_call.1} parent=1 // pred_region
      _
    $region21: #{tpu_custom_call.1} parent=1 // pred_fallthru
      _
    // Predicated region
    $region22: #{tpu_custom_call.1} parent=1 // pred_check
      _
    $region23: #{tpu_custom_call.1} parent=1 // pred_check_branch
      %46 = sbr.rel (0) target = $region25
    $region24: #{tpu_custom_call.1} parent=1 // pred_region
      _
    $region25: #{tpu_custom_call.1} parent=1 // pred_fallthru
      _
    // Predicated region
    $region26: #{tpu_custom_call.1} parent=1 // pred_check
      _
    $region27: #{tpu_custom_call.1} parent=1 // pred_check_branch
      %48 = sbr.rel (0) target = $region29
    $region28: #{tpu_custom_call.1} parent=1 // pred_region
      _
    $region29: #{tpu_custom_call.1} parent=1 // pred_fallthru
      _
    // Predicated region
    $region30: #{tpu_custom_call.1} parent=1 // pred_check
      _
    $region31: #{tpu_custom_call.1} parent=1 // pred_check_branch
      %50 = sbr.rel (0) target = $region33
    $region32: #{tpu_custom_call.1} parent=1 // pred_region
      _
    $region33: #{tpu_custom_call.1} parent=1 // pred_fallthru
      _
    // Predicated region
    $region34: #{tpu_custom_call.1} parent=1 // pred_check
      _
    $region35: #{tpu_custom_call.1} parent=1 // pred_check_branch
      %52 = sbr.rel (0) target = $region37
    $region36: #{tpu_custom_call.1} parent=1 // pred_region
      _
    $region37: #{tpu_custom_call.1} parent=1 // pred_fallthru
      _
    // Predicated region
    $region38: #{tpu_custom_call.1} parent=1 // pred_check
      _
    $region39: #{tpu_custom_call.1} parent=1 // pred_check_branch
      %54 = sbr.rel (0) target = $region41
    $region40: #{tpu_custom_call.1} parent=1 // pred_region
      _
    $region41: #{tpu_custom_call.1} parent=1 // pred_fallthru
      _
    // Predicated region
    $region42: #{tpu_custom_call.1} parent=1 // pred_check
      _
    $region43: #{tpu_custom_call.1} parent=1 // pred_check_branch
      %56 = sbr.rel (0) target = $region45
    $region44: #{tpu_custom_call.1} parent=1 // pred_region
      _
    $region45: #{tpu_custom_call.1} parent=1 // pred_fallthru
      _
    // Predicated region
    $region46: #{tpu_custom_call.1} parent=1 // pred_check
      _
    $region47: #{tpu_custom_call.1} parent=1 // pred_check_branch
      %58 = sbr.rel (0) target = $region49
    $region48: #{tpu_custom_call.1} parent=1 // pred_region
      _
    $region49: #{tpu_custom_call.1} parent=1 // pred_fallthru
      _
    // Predicated region
    $region50: #{tpu_custom_call.1} parent=1 // pred_check
      _
    $region51: #{tpu_custom_call.1} parent=1 // pred_check_branch
      %60 = sbr.rel (0) target = $region53
    $region52: #{tpu_custom_call.1} parent=1 // pred_region
      %61 = dma.done [#allocation3], 64
    $region53: #{tpu_custom_call.1} parent=1 // pred_fallthru
      _
    // Predicated region
    $region54: #{tpu_custom_call.1} parent=1 // pred_check
      _
    $region55: #{tpu_custom_call.1} parent=1 // pred_check_branch
      %63 = sbr.rel (0) target = $region57
    $region56: #{tpu_custom_call.1} parent=1 // pred_region
      %64 = dma.done [#allocation5], 64
    $region57: #{tpu_custom_call.1} parent=1 // pred_fallthru
      _
    %v66 = vld [vmem:[%s0] sm:$0xf]
    %v67 = vld [vmem:[%s0 + $0x4] sm:$0xf]
    %v68 = vld [vmem:[%s0 + $0x8] sm:$0xf]
    %v69 = vld [vmem:[%s0 + $0xc] sm:$0xf]
    %v70 = vld [vmem:[%s0 + $0x10] sm:$0xf]
    %v71 = vld [vmem:[%s0 + $0x14] sm:$0xf]
    %v72 = vld [vmem:[%s0 + $0x18] sm:$0xf]
    %v73 = vld [vmem:[%s0 + $0x1c] sm:$0xf]
    %v74 = vld [vmem:[%s1] sm:$0xf]
    %v75 = vld [vmem:[%s1 + $0x4] sm:$0xf]
    %v76 = vld [vmem:[%s1 + $0x8] sm:$0xf]
    %v77 = vld [vmem:[%s1 + $0xc] sm:$0xf]
    %v78 = vld [vmem:[%s1 + $0x10] sm:$0xf]
    %v79 = vld [vmem:[%s1 + $0x14] sm:$0xf]
    %v80 = vld [vmem:[%s1 + $0x18] sm:$0xf]
    %v81 = vld [vmem:[%s1 + $0x1c] sm:$0xf]
    %v90 = vunpack.c.l.b16 %v66
    %v91 = vunpack.c.l.b16 %v67
    %v92 = vunpack.c.l.b16 %v68
    %v93 = vunpack.c.l.b16 %v69
    %v94 = vunpack.c.l.b16 %v70
    %v95 = vunpack.c.l.b16 %v71
    %v96 = vunpack.c.l.b16 %v72
    %v97 = vunpack.c.l.b16 %v73
    %v98 = vpack.c.b16 %v91, %v90
    %v99 = vpack.c.b16 %v93, %v92
    %v100 = vpack.c.b16 %v95, %v94
    %v101 = vpack.c.b16 %v97, %v96
    %v110 = vunpack.c.l.b16 %v74
    %v111 = vunpack.c.l.b16 %v75
    %v112 = vunpack.c.l.b16 %v76
    %v113 = vunpack.c.l.b16 %v77
    %v114 = vunpack.c.l.b16 %v78
    %v115 = vunpack.c.l.b16 %v79
    %v116 = vunpack.c.l.b16 %v80
    %v117 = vunpack.c.l.b16 %v81
    %v118 = vpack.c.b16 %v111, %v110
    %v119 = vpack.c.b16 %v113, %v112
    %v120 = vpack.c.b16 %v115, %v114
    %v121 = vpack.c.b16 %v117, %v116
    %vm126 = vcmask 523264
    %v128 = vsel %vm126, %v98, 0
    %v131 = vsel %vm126, %v99, 0
    %v134 = vsel %vm126, %v100, 0
    %v137 = vsel %vm126, %v101, 0
    %139 = vmatprep.subr.bf16.mxu0 0
    %140 = vmatpush1.bf16.msra.mxu0 %v118
    %141 = vmatprep.subr.bf16.mxu0 0
    %142 = vmatpush1.bf16.msra.mxu0 %v119
    %143 = vmatprep.subr.bf16.mxu0 0
    %144 = vmatpush1.bf16.msra.mxu0 %v120
    %145 = vmatprep.subr.bf16.mxu0 0
    %146 = vmatpush1.bf16.msra.mxu0 %v121
    %147 = vmatprep.subr.bf16.mxu0 0
    %148 = vmatpush1.bf16.msra.mxu0 0
    %149 = vmatprep.subr.bf16.mxu0 0
    %150 = vmatpush1.bf16.msra.mxu0 0
    %151 = vmatprep.subr.bf16.mxu0 0
    %152 = vmatpush1.bf16.msra.mxu0 0
    %153 = vmatprep.subr.bf16.mxu0 0
    %154 = vmatpush1.bf16.msra.mxu0 0
    %155 = vmatprep.subr.bf16.mxu0 0
    %156 = vmatpush1.bf16.msra.mxu0 0
    %157 = vmatprep.subr.bf16.mxu0 0
    %158 = vmatpush1.bf16.msra.mxu0 0
    %159 = vmatprep.subr.bf16.mxu0 0
    %160 = vmatpush1.bf16.msra.mxu0 0
    %161 = vmatprep.subr.bf16.mxu0 0
    %162 = vmatpush1.bf16.msra.mxu0 0
    %163 = vmatprep.subr.bf16.mxu0 0
    %164 = vmatpush1.bf16.msra.mxu0 0
    %165 = vmatprep.subr.bf16.mxu0 0
    %166 = vmatpush1.bf16.msra.mxu0 0
    %167 = vmatprep.subr.bf16.mxu0 0
    %168 = vmatpush1.bf16.msra.mxu0 0
    %169 = vmatprep.subr.bf16.mxu0 0
    %170 = vmatpush1.bf16.msra.mxu0 0
    %171 = vmatprep.mubr.bf16.mxu0 0
    %172 = vmatmul.mubr.bf16.gmra.mrb[0].mxu0 %v128
    %v173 = vpop.f32.mrb[0].mxu0
    %v174 = vadd.f32 0.0, %v173
    %v175 = vpop.f32.mrb[0].mxu0
    %v176 = vpop.f32.mrb[0].mxu0
    %v177 = vadd.f32 0.0, %v176
    %v178 = vpop.f32.mrb[0].mxu0
    %179 = vmatprep.mubr.bf16.mxu0 0
    %180 = vmatmul.mubr.bf16.gmra.mrb[0].mxu0 %v131
    %v181 = vpop.f32.mrb[0].mxu0
    %v182 = vadd.f32 0.0, %v181
    %v183 = vpop.f32.mrb[0].mxu0
    %v184 = vpop.f32.mrb[0].mxu0
    %v185 = vadd.f32 0.0, %v184
    %v186 = vpop.f32.mrb[0].mxu0
    %187 = vmatprep.mubr.bf16.mxu0 0
    %188 = vmatmul.mubr.bf16.gmra.mrb[0].mxu0 %v134
    %v189 = vpop.f32.mrb[0].mxu0
    %v190 = vadd.f32 0.0, %v189
    %v191 = vpop.f32.mrb[0].mxu0
    %v192 = vpop.f32.mrb[0].mxu0
    %v193 = vadd.f32 0.0, %v192
    %v194 = vpop.f32.mrb[0].mxu0
    %195 = vmatprep.mubr.bf16.mxu0 0
    %196 = vmatmul.mubr.bf16.gmra.mrb[0].mxu0 %v137
    %v197 = vpop.f32.mrb[0].mxu0
    %v198 = vadd.f32 0.0, %v197
    %v199 = vpop.f32.mrb[0].mxu0
    %v200 = vpop.f32.mrb[0].mxu0
    %v201 = vadd.f32 0.0, %v200
    %v202 = vpop.f32.mrb[0].mxu0
    %203 = vdwg.mxu0
    %v204 = vpack.c.bf16 %v177, %v174
    %v205 = vpack.c.bf16 %v185, %v182
    %v206 = vpack.c.bf16 %v193, %v190
    %v207 = vpack.c.bf16 %v201, %v198
    %v208 = vld [vmem:[#allocation2] sm:$0xf]
    %v209 = vld [vmem:[#allocation4] sm:$0xf]
    %vm210 = vcmask 64512
    %v212 = vsel %vm210, %v204, 0
    %v215 = vsel %vm210, %v205, 0
    %v218 = vsel %vm210, %v206, 0
    %v221 = vsel %vm210, %v207, 0
    %vm223 = vcmask 1043456
    %v225 = vsel %vm223, %v209, 0
    %227 = vmatprep.subr.bf16.mxu0 0
    %228 = vmatpush1.bf16.msra.mxu0 %v225
    %229 = vmatprep.subr.bf16.mxu0 0
    %230 = vmatpush1.bf16.msra.mxu0 0
    %231 = vmatprep.subr.bf16.mxu0 0
    %232 = vmatpush1.bf16.msra.mxu0 0
    %233 = vmatprep.subr.bf16.mxu0 0
    %234 = vmatpush1.bf16.msra.mxu0 0
    %235 = vmatprep.subr.bf16.mxu0 0
    %236 = vmatpush1.bf16.msra.mxu0 0
    %237 = vmatprep.subr.bf16.mxu0 0
    %238 = vmatpush1.bf16.msra.mxu0 0
    %239 = vmatprep.subr.bf16.mxu0 0
    %240 = vmatpush1.bf16.msra.mxu0 0
    %241 = vmatprep.subr.bf16.mxu0 0
    %242 = vmatpush1.bf16.msra.mxu0 0
    %243 = vmatprep.subr.bf16.mxu0 0
    %244 = vmatpush1.bf16.msra.mxu0 0
    %245 = vmatprep.subr.bf16.mxu0 0
    %246 = vmatpush1.bf16.msra.mxu0 0
    %247 = vmatprep.subr.bf16.mxu0 0
    %248 = vmatpush1.bf16.msra.mxu0 0
    %249 = vmatprep.subr.bf16.mxu0 0
    %250 = vmatpush1.bf16.msra.mxu0 0
    %251 = vmatprep.subr.bf16.mxu0 0
    %252 = vmatpush1.bf16.msra.mxu0 0
    %253 = vmatprep.subr.bf16.mxu0 0
    %254 = vmatpush1.bf16.msra.mxu0 0
    %255 = vmatprep.subr.bf16.mxu0 0
    %256 = vmatpush1.bf16.msra.mxu0 0
    %257 = vmatprep.subr.bf16.mxu0 0
    %258 = vmatpush1.bf16.msra.mxu0 0
    %259 = vmatprep.mubr.bf16.mxu0 0
    %260 = vmatmul.mubr.bf16.gmra.mrb[0].mxu0 %v212
    %v261 = vpop.f32.mrb[0].mxu0
    %v262 = vadd.f32 0.0, %v261
    %v263 = vpop.f32.mrb[0].mxu0
    %v264 = vpop.f32.mrb[0].mxu0
    %v265 = vadd.f32 0.0, %v264
    %v266 = vpop.f32.mrb[0].mxu0
    %267 = vmatprep.mubr.bf16.mxu0 0
    %268 = vmatmul.mubr.bf16.gmra.mrb[0].mxu0 %v215
    %v269 = vpop.f32.mrb[0].mxu0
    %v270 = vadd.f32 0.0, %v269
    %v271 = vpop.f32.mrb[0].mxu0
    %v272 = vpop.f32.mrb[0].mxu0
    %v273 = vadd.f32 0.0, %v272
    %v274 = vpop.f32.mrb[0].mxu0
    %275 = vmatprep.mubr.bf16.mxu0 0
    %276 = vmatmul.mubr.bf16.gmra.mrb[0].mxu0 %v218
    %v277 = vpop.f32.mrb[0].mxu0
    %v278 = vadd.f32 0.0, %v277
    %v279 = vpop.f32.mrb[0].mxu0
    %v280 = vpop.f32.mrb[0].mxu0
    %v281 = vadd.f32 0.0, %v280
    %v282 = vpop.f32.mrb[0].mxu0
    %283 = vmatprep.mubr.bf16.mxu0 0
    %284 = vmatmul.mubr.bf16.gmra.mrb[0].mxu0 %v221
    %v285 = vpop.f32.mrb[0].mxu0
    %v286 = vadd.f32 0.0, %v285
    %v287 = vpop.f32.mrb[0].mxu0
    %v288 = vpop.f32.mrb[0].mxu0
    %v289 = vadd.f32 0.0, %v288
    %v290 = vpop.f32.mrb[0].mxu0
    %291 = vdwg.mxu0
    %v293 = vsel %vm210, %v118, 0
    %v296 = vsel %vm210, %v119, 0
    %v299 = vsel %vm210, %v120, 0
    %v302 = vsel %vm210, %v121, 0
    %v305 = vsel %vm223, %v208, 0
    %307 = vmatprep.subr.bf16.mxu0 0
    %308 = vmatpush1.bf16.msra.mxu0 %v305
    %309 = vmatprep.subr.bf16.mxu0 0
    %310 = vmatpush1.bf16.msra.mxu0 0
    %311 = vmatprep.subr.bf16.mxu0 0
    %312 = vmatpush1.bf16.msra.mxu0 0
    %313 = vmatprep.subr.bf16.mxu0 0
    %314 = vmatpush1.bf16.msra.mxu0 0
    %315 = vmatprep.subr.bf16.mxu0 0
    %316 = vmatpush1.bf16.msra.mxu0 0
    %317 = vmatprep.subr.bf16.mxu0 0
    %318 = vmatpush1.bf16.msra.mxu0 0
    %319 = vmatprep.subr.bf16.mxu0 0
    %320 = vmatpush1.bf16.msra.mxu0 0
    %321 = vmatprep.subr.bf16.mxu0 0
    %322 = vmatpush1.bf16.msra.mxu0 0
    %323 = vmatprep.subr.bf16.mxu0 0
    %324 = vmatpush1.bf16.msra.mxu0 0
    %325 = vmatprep.subr.bf16.mxu0 0
    %326 = vmatpush1.bf16.msra.mxu0 0
    %327 = vmatprep.subr.bf16.mxu0 0
    %328 = vmatpush1.bf16.msra.mxu0 0
    %329 = vmatprep.subr.bf16.mxu0 0
    %330 = vmatpush1.bf16.msra.mxu0 0
    %331 = vmatprep.subr.bf16.mxu0 0
    %332 = vmatpush1.bf16.msra.mxu0 0
    %333 = vmatprep.subr.bf16.mxu0 0
    %334 = vmatpush1.bf16.msra.mxu0 0
    %335 = vmatprep.subr.bf16.mxu0 0
    %336 = vmatpush1.bf16.msra.mxu0 0
    %337 = vmatprep.subr.bf16.mxu0 0
    %338 = vmatpush1.bf16.msra.mxu0 0
    %339 = vmatprep.mubr.bf16.mxu0 0
    %340 = vmatmul.mubr.bf16.gmra.mrb[0].mxu0 %v293
    %v341 = vpop.f32.mrb[0].mxu0
    %v342 = vadd.f32 %v262, %v341
    %v343 = vpop.f32.mrb[0].mxu0
    %v344 = vpop.f32.mrb[0].mxu0
    %v345 = vadd.f32 %v265, %v344
    %v346 = vpop.f32.mrb[0].mxu0
    %347 = vmatprep.mubr.bf16.mxu0 0
    %348 = vmatmul.mubr.bf16.gmra.mrb[0].mxu0 %v296
    %v349 = vpop.f32.mrb[0].mxu0
    %v350 = vadd.f32 %v270, %v349
    %v351 = vpop.f32.mrb[0].mxu0
    %v352 = vpop.f32.mrb[0].mxu0
    %v353 = vadd.f32 %v273, %v352
    %v354 = vpop.f32.mrb[0].mxu0
    %355 = vmatprep.mubr.bf16.mxu0 0
    %356 = vmatmul.mubr.bf16.gmra.mrb[0].mxu0 %v299
    %v357 = vpop.f32.mrb[0].mxu0
    %v358 = vadd.f32 %v278, %v357
    %v359 = vpop.f32.mrb[0].mxu0
    %v360 = vpop.f32.mrb[0].mxu0
    %v361 = vadd.f32 %v281, %v360
    %v362 = vpop.f32.mrb[0].mxu0
    %363 = vmatprep.mubr.bf16.mxu0 0
    %364 = vmatmul.mubr.bf16.gmra.mrb[0].mxu0 %v302
    %v365 = vpop.f32.mrb[0].mxu0
    %v366 = vadd.f32 %v286, %v365
    %v367 = vpop.f32.mrb[0].mxu0
    %v368 = vpop.f32.mrb[0].mxu0
    %v369 = vadd.f32 %v289, %v368
    %v370 = vpop.f32.mrb[0].mxu0
    %371 = vdwg.mxu0
    %v372 = vld [vmem:[%s4] sm:$0x1]
    %v374 = vlaneseq
    %v375 = vshrl.u32 %v374, 7
    %v376 = vsub.s32 0, %v375
    %v377 = vrot.slane %v372, %v376
    %v379 = vadd.f32 %v342, %v377
    %v380 = vadd.f32 %v345, %v377
    %v381 = vadd.f32 %v350, %v377
    %v382 = vadd.f32 %v353, %v377
    %v383 = vadd.f32 %v358, %v377
    %v384 = vadd.f32 %v361, %v377
    %v385 = vadd.f32 %v366, %v377
    %v386 = vadd.f32 %v369, %v377
    %v387 = vmax.f32 %v379, 0.0
    %v388 = vmax.f32 %v380, 0.0
    %v389 = vmax.f32 %v381, 0.0
    %v390 = vmax.f32 %v382, 0.0
    %v391 = vmax.f32 %v383, 0.0
    %v392 = vmax.f32 %v384, 0.0
    %v393 = vmax.f32 %v385, 0.0
    %v394 = vmax.f32 %v386, 0.0
    %v395 = vpack.c.bf16 %v388, %v387
    %v396 = vpack.c.bf16 %v390, %v389
    %v397 = vpack.c.bf16 %v392, %v391
    %v398 = vpack.c.bf16 %v394, %v393
    %399 = vmatprep.subr.bf16.mxu0 0
    %400 = vmatpush1.bf16.msra.mxu0 %v395
    %401 = vmatprep.subr.bf16.mxu0 0
    %402 = vmatpush1.bf16.msra.mxu0 %v396
    %403 = vmatprep.subr.bf16.mxu0 0
    %404 = vmatpush1.bf16.msra.mxu0 %v397
    %405 = vmatprep.subr.bf16.mxu0 0
    %406 = vmatpush1.bf16.msra.mxu0 %v398
    %407 = vmatprep.subr.bf16.mxu0 0
    %408 = vmatpush1.bf16.msra.mxu0 0
    %409 = vmatprep.subr.bf16.mxu0 0
    %410 = vmatpush1.bf16.msra.mxu0 0
    %411 = vmatprep.subr.bf16.mxu0 0
    %412 = vmatpush1.bf16.msra.mxu0 0
    %413 = vmatprep.subr.bf16.mxu0 0
    %414 = vmatpush1.bf16.msra.mxu0 0
    %415 = vmatprep.subr.bf16.mxu0 0
    %416 = vmatpush1.bf16.msra.mxu0 0
    %417 = vmatprep.subr.bf16.mxu0 0
    %418 = vmatpush1.bf16.msra.mxu0 0
    %419 = vmatprep.subr.bf16.mxu0 0
    %420 = vmatpush1.bf16.msra.mxu0 0
    %421 = vmatprep.subr.bf16.mxu0 0
    %422 = vmatpush1.bf16.msra.mxu0 0
    %423 = vmatprep.subr.bf16.mxu0 0
    %424 = vmatpush1.bf16.msra.mxu0 0
    %425 = vmatprep.subr.bf16.mxu0 0
    %426 = vmatpush1.bf16.msra.mxu0 0
    %427 = vmatprep.subr.bf16.mxu0 0
    %428 = vmatpush1.bf16.msra.mxu0 0
    %429 = vmatprep.subr.bf16.mxu0 0
    %430 = vmatpush1.bf16.msra.mxu0 0
    %431 = vmatprep.mubr.bf16.mxu0 0
    %432 = vmatmul.mubr.bf16.gmra.mrb[0].mxu0 %v128
    %v433 = vpop.f32.mrb[0].mxu0
    %v434 = vadd.f32 0.0, %v433
    %v435 = vpop.f32.mrb[0].mxu0
    %v436 = vpop.f32.mrb[0].mxu0
    %v437 = vadd.f32 0.0, %v436
    %v438 = vpop.f32.mrb[0].mxu0
    %439 = vmatprep.mubr.bf16.mxu0 0
    %440 = vmatmul.mubr.bf16.gmra.mrb[0].mxu0 %v131
    %v441 = vpop.f32.mrb[0].mxu0
    %v442 = vadd.f32 0.0, %v441
    %v443 = vpop.f32.mrb[0].mxu0
    %v444 = vpop.f32.mrb[0].mxu0
    %v445 = vadd.f32 0.0, %v444
    %v446 = vpop.f32.mrb[0].mxu0
    %447 = vmatprep.mubr.bf16.mxu0 0
    %448 = vmatmul.mubr.bf16.gmra.mrb[0].mxu0 %v134
    %v449 = vpop.f32.mrb[0].mxu0
    %v450 = vadd.f32 0.0, %v449
    %v451 = vpop.f32.mrb[0].mxu0
    %v452 = vpop.f32.mrb[0].mxu0
    %v453 = vadd.f32 0.0, %v452
    %v454 = vpop.f32.mrb[0].mxu0
    %455 = vmatprep.mubr.bf16.mxu0 0
    %456 = vmatmul.mubr.bf16.gmra.mrb[0].mxu0 %v137
    %v457 = vpop.f32.mrb[0].mxu0
    %v458 = vadd.f32 0.0, %v457
    %v459 = vpop.f32.mrb[0].mxu0
    %v460 = vpop.f32.mrb[0].mxu0
    %v461 = vadd.f32 0.0, %v460
    %v462 = vpop.f32.mrb[0].mxu0
    %463 = vdwg.mxu0
    %v464 = vpack.c.bf16 %v437, %v434
    %v465 = vpack.c.bf16 %v445, %v442
    %v466 = vpack.c.bf16 %v453, %v450
    %v467 = vpack.c.bf16 %v461, %v458
    %v468 = vld [vmem:[%s5] sm:$0xf]
    %v469 = vld [vmem:[%s5 + $0x4] sm:$0xf]
    %v470 = vld [vmem:[%s5 + $0x8] sm:$0xf]
    %v471 = vld [vmem:[%s5 + $0xc] sm:$0xf]
    %v472 = vld [vmem:[%s6] sm:$0xf]
    %v473 = vld [vmem:[%s6 + $0x4] sm:$0xf]
    %v474 = vld [vmem:[%s6 + $0x8] sm:$0xf]
    %v475 = vld [vmem:[%s6 + $0xc] sm:$0xf]
    %v480 = vunpack.c.l.b16 %v472
    %v481 = vunpack.c.l.b16 %v473
    %v482 = vunpack.c.l.b16 %v474
    %v483 = vunpack.c.l.b16 %v475
    %v484 = vpack.c.b16 %v481, %v480
    %v485 = vpack.c.b16 %v483, %v482
    %vm488 = vcmask 261120
    %v490 = vsel %vm488, %v464, 0
    %v493 = vsel %vm488, %v465, 0
    %v496 = vsel %vm488, %v466, 0
    %v499 = vsel %vm488, %v467, 0
    %501 = vmatprep.subr.bf16.mxu0 0
    %502 = vmatpush1.bf16.msra.mxu0 %v484
    %503 = vmatprep.subr.bf16.mxu0 0
    %504 = vmatpush1.bf16.msra.mxu0 %v485
    %505 = vmatprep.subr.bf16.mxu0 0
    %506 = vmatpush1.bf16.msra.mxu0 0
    %507 = vmatprep.subr.bf16.mxu0 0
    %508 = vmatpush1.bf16.msra.mxu0 0
    %509 = vmatprep.subr.bf16.mxu0 0
    %510 = vmatpush1.bf16.msra.mxu0 0
    %511 = vmatprep.subr.bf16.mxu0 0
    %512 = vmatpush1.bf16.msra.mxu0 0
    %513 = vmatprep.subr.bf16.mxu0 0
    %514 = vmatpush1.bf16.msra.mxu0 0
    %515 = vmatprep.subr.bf16.mxu0 0
    %516 = vmatpush1.bf16.msra.mxu0 0
    %517 = vmatprep.subr.bf16.mxu0 0
    %518 = vmatpush1.bf16.msra.mxu0 0
    %519 = vmatprep.subr.bf16.mxu0 0
    %520 = vmatpush1.bf16.msra.mxu0 0
    %521 = vmatprep.subr.bf16.mxu0 0
    %522 = vmatpush1.bf16.msra.mxu0 0
    %523 = vmatprep.subr.bf16.mxu0 0
    %524 = vmatpush1.bf16.msra.mxu0 0
    %525 = vmatprep.subr.bf16.mxu0 0
    %526 = vmatpush1.bf16.msra.mxu0 0
    %527 = vmatprep.subr.bf16.mxu0 0
    %528 = vmatpush1.bf16.msra.mxu0 0
    %529 = vmatprep.subr.bf16.mxu0 0
    %530 = vmatpush1.bf16.msra.mxu0 0
    %531 = vmatprep.subr.bf16.mxu0 0
    %532 = vmatpush1.bf16.msra.mxu0 0
    %533 = vmatprep.mubr.bf16.mxu0 0
    %534 = vmatmul.mubr.bf16.gmra.mrb[0].mxu0 %v490
    %v535 = vpop.f32.mrb[0].mxu0
    %v536 = vadd.f32 0.0, %v535
    %v537 = vpop.f32.mrb[0].mxu0
    %v538 = vpop.f32.mrb[0].mxu0
    %v539 = vadd.f32 0.0, %v538
    %v540 = vpop.f32.mrb[0].mxu0
    %541 = vmatprep.mubr.bf16.mxu0 0
    %542 = vmatmul.mubr.bf16.gmra.mrb[0].mxu0 %v493
    %v543 = vpop.f32.mrb[0].mxu0
    %v544 = vadd.f32 0.0, %v543
    %v545 = vpop.f32.mrb[0].mxu0
    %v546 = vpop.f32.mrb[0].mxu0
    %v547 = vadd.f32 0.0, %v546
    %v548 = vpop.f32.mrb[0].mxu0
    %549 = vmatprep.mubr.bf16.mxu0 0
    %550 = vmatmul.mubr.bf16.gmra.mrb[0].mxu0 %v496
    %v551 = vpop.f32.mrb[0].mxu0
    %v552 = vadd.f32 0.0, %v551
    %v553 = vpop.f32.mrb[0].mxu0
    %v554 = vpop.f32.mrb[0].mxu0
    %v555 = vadd.f32 0.0, %v554
    %v556 = vpop.f32.mrb[0].mxu0
    %557 = vmatprep.mubr.bf16.mxu0 0
    %558 = vmatmul.mubr.bf16.gmra.mrb[0].mxu0 %v499
    %v559 = vpop.f32.mrb[0].mxu0
    %v560 = vadd.f32 0.0, %v559
    %v561 = vpop.f32.mrb[0].mxu0
    %v562 = vpop.f32.mrb[0].mxu0
    %v563 = vadd.f32 0.0, %v562
    %v564 = vpop.f32.mrb[0].mxu0
    %565 = vdwg.mxu0
    %v570 = vunpack.c.l.b16 %v468
    %v571 = vunpack.c.l.b16 %v469
    %v572 = vunpack.c.l.b16 %v470
    %v573 = vunpack.c.l.b16 %v471
    %v574 = vpack.c.b16 %v571, %v570
    %v575 = vpack.c.b16 %v573, %v572
    %v579 = vsel %vm488, %v395, 0
    %v582 = vsel %vm488, %v396, 0
    %v585 = vsel %vm488, %v397, 0
    %v588 = vsel %vm488, %v398, 0
    %590 = vmatprep.subr.bf16.mxu0 0
    %591 = vmatpush1.bf16.msra.mxu0 %v574
    %592 = vmatprep.subr.bf16.mxu0 0
    %593 = vmatpush1.bf16.msra.mxu0 %v575
    %594 = vmatprep.subr.bf16.mxu0 0
    %595 = vmatpush1.bf16.msra.mxu0 0
    %596 = vmatprep.subr.bf16.mxu0 0
    %597 = vmatpush1.bf16.msra.mxu0 0
    %598 = vmatprep.subr.bf16.mxu0 0
    %599 = vmatpush1.bf16.msra.mxu0 0
    %600 = vmatprep.subr.bf16.mxu0 0
    %601 = vmatpush1.bf16.msra.mxu0 0
    %602 = vmatprep.subr.bf16.mxu0 0
    %603 = vmatpush1.bf16.msra.mxu0 0
    %604 = vmatprep.subr.bf16.mxu0 0
    %605 = vmatpush1.bf16.msra.mxu0 0
    %606 = vmatprep.subr.bf16.mxu0 0
    %607 = vmatpush1.bf16.msra.mxu0 0
    %608 = vmatprep.subr.bf16.mxu0 0
    %609 = vmatpush1.bf16.msra.mxu0 0
    %610 = vmatprep.subr.bf16.mxu0 0
    %611 = vmatpush1.bf16.msra.mxu0 0
    %612 = vmatprep.subr.bf16.mxu0 0
    %613 = vmatpush1.bf16.msra.mxu0 0
    %614 = vmatprep.subr.bf16.mxu0 0
    %615 = vmatpush1.bf16.msra.mxu0 0
    %616 = vmatprep.subr.bf16.mxu0 0
    %617 = vmatpush1.bf16.msra.mxu0 0
    %618 = vmatprep.subr.bf16.mxu0 0
    %619 = vmatpush1.bf16.msra.mxu0 0
    %620 = vmatprep.subr.bf16.mxu0 0
    %621 = vmatpush1.bf16.msra.mxu0 0
    %622 = vmatprep.mubr.bf16.mxu0 0
    %623 = vmatmul.mubr.bf16.gmra.mrb[0].mxu0 %v579
    %v624 = vpop.f32.mrb[0].mxu0
    %v625 = vadd.f32 %v536, %v624
    %v626 = vpop.f32.mrb[0].mxu0
    %v627 = vpop.f32.mrb[0].mxu0
    %v628 = vadd.f32 %v539, %v627
    %v629 = vpop.f32.mrb[0].mxu0
    %630 = vmatprep.mubr.bf16.mxu0 0
    %631 = vmatmul.mubr.bf16.gmra.mrb[0].mxu0 %v582
    %v632 = vpop.f32.mrb[0].mxu0
    %v633 = vadd.f32 %v544, %v632
    %v634 = vpop.f32.mrb[0].mxu0
    %v635 = vpop.f32.mrb[0].mxu0
    %v636 = vadd.f32 %v547, %v635
    %v637 = vpop.f32.mrb[0].mxu0
    %638 = vmatprep.mubr.bf16.mxu0 0
    %639 = vmatmul.mubr.bf16.gmra.mrb[0].mxu0 %v585
    %v640 = vpop.f32.mrb[0].mxu0
    %v641 = vadd.f32 %v552, %v640
    %v642 = vpop.f32.mrb[0].mxu0
    %v643 = vpop.f32.mrb[0].mxu0
    %v644 = vadd.f32 %v555, %v643
    %v645 = vpop.f32.mrb[0].mxu0
    %646 = vmatprep.mubr.bf16.mxu0 0
    %647 = vmatmul.mubr.bf16.gmra.mrb[0].mxu0 %v588
    %v648 = vpop.f32.mrb[0].mxu0
    %v649 = vadd.f32 %v560, %v648
    %v650 = vpop.f32.mrb[0].mxu0
    %v651 = vpop.f32.mrb[0].mxu0
    %v652 = vadd.f32 %v563, %v651
    %v653 = vpop.f32.mrb[0].mxu0
    %654 = vdwg.mxu0
    %v655 = vld [vmem:[%s7] sm:$0x1]
    %v657 = vlaneseq
    %v658 = vshrl.u32 %v657, 7
    %v659 = vsub.s32 0, %v658
    %v660 = vrot.slane %v655, %v659
    %v662 = vadd.f32 %v625, %v660
    %v663 = vadd.f32 %v628, %v660
    %v664 = vadd.f32 %v633, %v660
    %v665 = vadd.f32 %v636, %v660
    %v666 = vadd.f32 %v641, %v660
    %v667 = vadd.f32 %v644, %v660
    %v668 = vadd.f32 %v649, %v660
    %v669 = vadd.f32 %v652, %v660
    %v670 = vmax.f32 %v662, 0.0
    %v671 = vmax.f32 %v663, 0.0
    %v672 = vmax.f32 %v664, 0.0
    %v673 = vmax.f32 %v665, 0.0
    %v674 = vmax.f32 %v666, 0.0
    %v675 = vmax.f32 %v667, 0.0
    %v676 = vmax.f32 %v668, 0.0
    %v677 = vmax.f32 %v669, 0.0
    %v678 = vpack.c.bf16 %v671, %v670
    %v679 = vpack.c.bf16 %v673, %v672
    %v680 = vpack.c.bf16 %v675, %v674
    %v681 = vpack.c.bf16 %v677, %v676
    %v682 = vld [vmem:[%s8] sm:$0xf]
    %v683 = vld [vmem:[%s8 + $0x4] sm:$0xf]
    %v684 = vld [vmem:[%s8 + $0x8] sm:$0xf]
    %v685 = vld [vmem:[%s8 + $0xc] sm:$0xf]
    %v686 = vld [vmem:[%s9] sm:$0x1]
    %v688 = vlaneseq
    %v689 = vshrl.u32 %v688, 7
    %v690 = vsub.s32 0, %v689
    %v691 = vrot.slane %v686, %v690
    %v697 = vunpack.c.l.b16 %v682
    %v698 = vunpack.c.l.b16 %v683
    %v699 = vunpack.c.l.b16 %v684
    %v700 = vunpack.c.l.b16 %v685
    %v701 = vpack.c.b16 %v698, %v697
    %v702 = vpack.c.b16 %v700, %v699
    %v706 = vsel %vm488, %v678, 0
    %v709 = vsel %vm488, %v679, 0
    %v712 = vsel %vm488, %v680, 0
    %v715 = vsel %vm488, %v681, 0
    %717 = vmatprep.subr.bf16.mxu0 0
    %718 = vmatpush1.bf16.msra.mxu0 %v701
    %719 = vmatprep.subr.bf16.mxu0 0
    %720 = vmatpush1.bf16.msra.mxu0 %v702
    %721 = vmatprep.subr.bf16.mxu0 0
    %722 = vmatpush1.bf16.msra.mxu0 0
    %723 = vmatprep.subr.bf16.mxu0 0
    %724 = vmatpush1.bf16.msra.mxu0 0
    %725 = vmatprep.subr.bf16.mxu0 0
    %726 = vmatpush1.bf16.msra.mxu0 0
    %727 = vmatprep.subr.bf16.mxu0 0
    %728 = vmatpush1.bf16.msra.mxu0 0
    %729 = vmatprep.subr.bf16.mxu0 0
    %730 = vmatpush1.bf16.msra.mxu0 0
    %731 = vmatprep.subr.bf16.mxu0 0
    %732 = vmatpush1.bf16.msra.mxu0 0
    %733 = vmatprep.subr.bf16.mxu0 0
    %734 = vmatpush1.bf16.msra.mxu0 0
    %735 = vmatprep.subr.bf16.mxu0 0
    %736 = vmatpush1.bf16.msra.mxu0 0
    %737 = vmatprep.subr.bf16.mxu0 0
    %738 = vmatpush1.bf16.msra.mxu0 0
    %739 = vmatprep.subr.bf16.mxu0 0
    %740 = vmatpush1.bf16.msra.mxu0 0
    %741 = vmatprep.subr.bf16.mxu0 0
    %742 = vmatpush1.bf16.msra.mxu0 0
    %743 = vmatprep.subr.bf16.mxu0 0
    %744 = vmatpush1.bf16.msra.mxu0 0
    %745 = vmatprep.subr.bf16.mxu0 0
    %746 = vmatpush1.bf16.msra.mxu0 0
    %747 = vmatprep.subr.bf16.mxu0 0
    %748 = vmatpush1.bf16.msra.mxu0 0
    %749 = vmatprep.mubr.bf16.mxu0 0
    %750 = vmatmul.mubr.bf16.gmra.mrb[0].mxu0 %v706
    %v751 = vpop.f32.mrb[0].mxu0
    %v752 = vadd.f32 %v691, %v751
    %v753 = vpop.f32.mrb[0].mxu0
    %v754 = vpop.f32.mrb[0].mxu0
    %v755 = vadd.f32 %v691, %v754
    %v756 = vpop.f32.mrb[0].mxu0
    %757 = vmatprep.mubr.bf16.mxu0 0
    %758 = vmatmul.mubr.bf16.gmra.mrb[0].mxu0 %v709
    %v759 = vpop.f32.mrb[0].mxu0
    %v760 = vadd.f32 %v691, %v759
    %v761 = vpop.f32.mrb[0].mxu0
    %v762 = vpop.f32.mrb[0].mxu0
    %v763 = vadd.f32 %v691, %v762
    %v764 = vpop.f32.mrb[0].mxu0
    %765 = vmatprep.mubr.bf16.mxu0 0
    %766 = vmatmul.mubr.bf16.gmra.mrb[0].mxu0 %v712
    %v767 = vpop.f32.mrb[0].mxu0
    %v768 = vadd.f32 %v691, %v767
    %v769 = vpop.f32.mrb[0].mxu0
    %v770 = vpop.f32.mrb[0].mxu0
    %v771 = vadd.f32 %v691, %v770
    %v772 = vpop.f32.mrb[0].mxu0
    %773 = vmatprep.mubr.bf16.mxu0 0
    %774 = vmatmul.mubr.bf16.gmra.mrb[0].mxu0 %v715
    %v775 = vpop.f32.mrb[0].mxu0
    %v776 = vadd.f32 %v691, %v775
    %v777 = vpop.f32.mrb[0].mxu0
    %v778 = vpop.f32.mrb[0].mxu0
    %v779 = vadd.f32 %v691, %v778
    %v780 = vpop.f32.mrb[0].mxu0
    %781 = vdwg.mxu0
    %v782 = vmax.f32 %v752, 0.0
    %v783 = vmax.f32 %v755, 0.0
    %v784 = vmax.f32 %v760, 0.0
    %v785 = vmax.f32 %v763, 0.0
    %v786 = vmax.f32 %v768, 0.0
    %v787 = vmax.f32 %v771, 0.0
    %v788 = vmax.f32 %v776, 0.0
    %v789 = vmax.f32 %v779, 0.0
    %v790 = vpack.c.bf16 %v783, %v782
    %v791 = vpack.c.bf16 %v785, %v784
    %v792 = vpack.c.bf16 %v787, %v786
    %v793 = vpack.c.bf16 %v789, %v788
    %v794 = vld [vmem:[%s10] sm:$0xf]
    %v795 = vld [vmem:[%s10 + $0x4] sm:$0xf]
    %v796 = vld [vmem:[%s10 + $0x8] sm:$0xf]
    %v797 = vld [vmem:[%s10 + $0xc] sm:$0xf]
    %v798 = vld [vmem:[%s11] sm:$0x1]
    %v800 = vlaneseq
    %v801 = vshrl.u32 %v800, 7
    %v802 = vsub.s32 0, %v801
    %v803 = vrot.slane %v798, %v802
    %v809 = vunpack.c.l.b16 %v794
    %v810 = vunpack.c.l.b16 %v795
    %v811 = vunpack.c.l.b16 %v796
    %v812 = vunpack.c.l.b16 %v797
    %v813 = vpack.c.b16 %v810, %v809
    %v814 = vpack.c.b16 %v812, %v811
    %v818 = vsel %vm488, %v790, 0
    %v821 = vsel %vm488, %v791, 0
    %v824 = vsel %vm488, %v792, 0
    %v827 = vsel %vm488, %v793, 0
    %829 = vmatprep.subr.bf16.mxu0 0
    %830 = vmatpush1.bf16.msra.mxu0 %v813
    %831 = vmatprep.subr.bf16.mxu0 0
    %832 = vmatpush1.bf16.msra.mxu0 %v814
    %833 = vmatprep.subr.bf16.mxu0 0
    %834 = vmatpush1.bf16.msra.mxu0 0
    %835 = vmatprep.subr.bf16.mxu0 0
    %836 = vmatpush1.bf16.msra.mxu0 0
    %837 = vmatprep.subr.bf16.mxu0 0
    %838 = vmatpush1.bf16.msra.mxu0 0
    %839 = vmatprep.subr.bf16.mxu0 0
    %840 = vmatpush1.bf16.msra.mxu0 0
    %841 = vmatprep.subr.bf16.mxu0 0
    %842 = vmatpush1.bf16.msra.mxu0 0
    %843 = vmatprep.subr.bf16.mxu0 0
    %844 = vmatpush1.bf16.msra.mxu0 0
    %845 = vmatprep.subr.bf16.mxu0 0
    %846 = vmatpush1.bf16.msra.mxu0 0
    %847 = vmatprep.subr.bf16.mxu0 0
    %848 = vmatpush1.bf16.msra.mxu0 0
    %849 = vmatprep.subr.bf16.mxu0 0
    %850 = vmatpush1.bf16.msra.mxu0 0
    %851 = vmatprep.subr.bf16.mxu0 0
    %852 = vmatpush1.bf16.msra.mxu0 0
    %853 = vmatprep.subr.bf16.mxu0 0
    %854 = vmatpush1.bf16.msra.mxu0 0
    %855 = vmatprep.subr.bf16.mxu0 0
    %856 = vmatpush1.bf16.msra.mxu0 0
    %857 = vmatprep.subr.bf16.mxu0 0
    %858 = vmatpush1.bf16.msra.mxu0 0
    %859 = vmatprep.subr.bf16.mxu0 0
    %860 = vmatpush1.bf16.msra.mxu0 0
    %861 = vmatprep.mubr.bf16.mxu0 0
    %862 = vmatmul.mubr.bf16.gmra.mrb[0].mxu0 %v818
    %v863 = vpop.f32.mrb[0].mxu0
    %v864 = vadd.f32 %v803, %v863
    %v865 = vpop.f32.mrb[0].mxu0
    %v866 = vpop.f32.mrb[0].mxu0
    %v867 = vadd.f32 %v803, %v866
    %v868 = vpop.f32.mrb[0].mxu0
    %869 = vmatprep.mubr.bf16.mxu0 0
    %870 = vmatmul.mubr.bf16.gmra.mrb[0].mxu0 %v821
    %v871 = vpop.f32.mrb[0].mxu0
    %v872 = vadd.f32 %v803, %v871
    %v873 = vpop.f32.mrb[0].mxu0
    %v874 = vpop.f32.mrb[0].mxu0
    %v875 = vadd.f32 %v803, %v874
    %v876 = vpop.f32.mrb[0].mxu0
    %877 = vmatprep.mubr.bf16.mxu0 0
    %878 = vmatmul.mubr.bf16.gmra.mrb[0].mxu0 %v824
    %v879 = vpop.f32.mrb[0].mxu0
    %v880 = vadd.f32 %v803, %v879
    %v881 = vpop.f32.mrb[0].mxu0
    %v882 = vpop.f32.mrb[0].mxu0
    %v883 = vadd.f32 %v803, %v882
    %v884 = vpop.f32.mrb[0].mxu0
    %885 = vmatprep.mubr.bf16.mxu0 0
    %886 = vmatmul.mubr.bf16.gmra.mrb[0].mxu0 %v827
    %v887 = vpop.f32.mrb[0].mxu0
    %v888 = vadd.f32 %v803, %v887
    %v889 = vpop.f32.mrb[0].mxu0
    %v890 = vpop.f32.mrb[0].mxu0
    %v891 = vadd.f32 %v803, %v890
    %v892 = vpop.f32.mrb[0].mxu0
    %893 = vdwg.mxu0
    %vm894 = vcmask 15360
    %895 = vst.msk [vmem:[%s12] sm:$0xff] %vm894, %v864
    %896 = vst.msk [vmem:[%s12 + $0x8] sm:$0xff] %vm894, %v867
    %897 = vst.msk [vmem:[%s12 + $0x10] sm:$0xff] %vm894, %v872
    %898 = vst.msk [vmem:[%s12 + $0x18] sm:$0xff] %vm894, %v875
    %899 = vst.msk [vmem:[%s12 + $0x20] sm:$0xff] %vm894, %v880
    %900 = vst.msk [vmem:[%s12 + $0x28] sm:$0xff] %vm894, %v883
    %901 = vst.msk [vmem:[%s12 + $0x30] sm:$0xff] %vm894, %v888
    %902 = vst.msk [vmem:[%s12 + $0x38] sm:$0xff] %vm894, %v891
    // Predicated region
    $region58: #{tpu_custom_call.1} parent=1 // pred_check
      _
    $region59: #{tpu_custom_call.1} parent=1 // pred_check_branch
      %904 = sbr.rel (0) target = $region61
    $region60: #{tpu_custom_call.1} parent=1 // pred_region
      _
    $region61: #{tpu_custom_call.1} parent=1 // pred_fallthru
      _
    // Predicated region
    $region62: #{tpu_custom_call.1} parent=1 // pred_check
      _
    $region63: #{tpu_custom_call.1} parent=1 // pred_check_branch
      %906 = sbr.rel (0) target = $region65
    $region64: #{tpu_custom_call.1} parent=1 // pred_region
      _
    $region65: #{tpu_custom_call.1} parent=1 // pred_fallthru
      _
    %907 = vsyncpa [#allocation3], 1
    %908 = vsyncpa [#allocation5], 1

</llo_original>
